<compile_context>
chip_gen: v6e
topology: v6e:2x2x1
jax: 0.10.0
libtpu: 0.0.40
codegen_flags: <defaults>
</compile_context>

<pallas_src>
import math

import jax
import jax.numpy as jnp
from jax import lax
from jax.experimental import pallas as pl
from jax.experimental.pallas import tpu as pltpu


def _round_up(x, m):
    return (x + m - 1) // m * m


# ----------------------------------------------------------------------------
# Pass 1: normalize class-weight rows once, emit W^T in the MXU dtype.
# ----------------------------------------------------------------------------
def _make_wnorm_t_kernel(num_classes, tile_c):
    def kernel(w_ref, wt_ref):
        # F.normalize(w, dim=1, eps=1e-12) == w * rsqrt(max(||w||^2, eps^2))
        w = w_ref[...].astype(jnp.float32)
        inv = lax.rsqrt(jnp.maximum(jnp.sum(w * w, axis=1, keepdims=True), 1e-24))
        wn = w * inv
        # Zero padded / stale class rows (partial edge block) so the main
        # kernel sees exact 0.0 cosines on padded class lanes.
        row = lax.broadcasted_iota(jnp.int32, wn.shape, 0)
        valid_rows = num_classes - pl.program_id(0) * tile_c
        wn = jnp.where(row < valid_rows, wn, 0.0)
        # Store transposed: classes land on the lane axis of the main matmul.
        wt_ref[...] = jnp.transpose(wn).astype(wt_ref.dtype)

    return kernel


# ----------------------------------------------------------------------------
# Pass 2: cosine -> online-softmax cross-entropy; margin applied only to the
# target logit in the per-batch-tile finalize.
# ----------------------------------------------------------------------------
def _make_aam_kernel(cos_m, sin_m, th, mm, scale, pad_cols, highest_precision):
    prec = lax.Precision.HIGHEST if highest_precision else None

    def kernel(label_ref, emb_ref, wt_ref, out_ref, m_acc, s_acc, t_acc):
        c_idx = pl.program_id(1)
        nc = pl.num_programs(1)

        # Reset the online-softmax accumulators at the start of each batch tile
        # (the class axis is the inner "arbitrary" reduction loop).
        @pl.when(c_idx == 0)
        def _():
            m_acc[...] = jnp.full_like(m_acc, -jnp.inf)
            s_acc[...] = jnp.zeros_like(s_acc)
            t_acc[...] = jnp.zeros_like(t_acc)

        # cosine tile [TB, TC] on the MXU (classes lane-dense).
        cosine = jnp.dot(emb_ref[...], wt_ref[...],
                         preferred_element_type=jnp.float32, precision=prec)
        tb, tc = cosine.shape
        logits = scale * cosine  # plain-cosine logits for the whole tile

        # Accumulate the target cosine (exactly one hit across class tiles).
        col = lax.broadcasted_iota(jnp.int32, (tb, tc), 1)
        is_target = col == (label_ref[...] - c_idx * tc)
        t_acc[...] += jnp.sum(jnp.where(is_target, cosine, 0.0),
                              axis=1, keepdims=True)

        # Online softmax accumulation (no per-element margin / padding math).
        m_prev = m_acc[...]
        m_new = jnp.maximum(m_prev, jnp.max(logits, axis=1, keepdims=True))
        s_acc[...] = (s_acc[...] * jnp.exp(m_prev - m_new)
                      + jnp.sum(jnp.exp(logits - m_new), axis=1, keepdims=True))
        m_acc[...] = m_new

        # Finalize once per batch tile: swap the target's plain-cosine logit
        # for the margin logit, drop padded-lane contributions, write the loss.
        @pl.when(c_idx == nc - 1)
        def _():
            m = m_acc[...]
            s = s_acc[...]
            cos_t = t_acc[...]
            sin_t = jnp.sqrt(jnp.maximum(1.0 - cos_t * cos_t, 0.0))
            phi_t = jnp.where(cos_t > th,
                              cos_t * cos_m - sin_t * sin_m,
                              cos_t - mm)
            lt_cos = scale * cos_t
            lt_phi = scale * phi_t      # phi_t <= cos_t, so lt_phi <= m always
            s_adj = s - jnp.exp(lt_cos - m) + jnp.exp(lt_phi - m)
            if pad_cols:
                # Padded class lanes have cosine == 0 exactly (pass 1 zeroing),
                # i.e. each contributed exp(0 - m) to the running sum.
                s_adj = s_adj - pad_cols * jnp.exp(-m)
            s_adj = jnp.maximum(s_adj, 1e-30)  # guard vs. rounding cancellation
            out_ref[...] = m + jnp.log(s_adj) - lt_phi

    return kernel


def aam_softmax_loss(embedding, weight, label, margin=0.2, scale=32.0,
                     tile_b=256, tile_c=1024, mxu_dtype=jnp.bfloat16):
    """embedding: [B, D], weight: [C, D], label: [B] int -> scalar loss."""
    B, D = embedding.shape
    C, D2 = weight.shape
    assert D == D2
    f32 = jnp.float32

    # Tile sizing: batch tiles multiple of 8 (sublanes), class tiles multiple
    # of 128 (lanes / lane-dense MXU output), D padded to a lane multiple.
    B8 = _round_up(B, 8)
    tile_b = min(_round_up(tile_b, 8), B8)
    # v7x has 2 TensorCores: keep >=2 tiles on the "parallel" batch axis.
    if B8 // tile_b < 2 and B8 >= 16:
        tile_b = _round_up((B8 + 1) // 2, 8)
    tile_c = min(_round_up(tile_c, 128), _round_up(C, 128))
    B_pad = _round_up(B8, tile_b)
    C_pad = _round_up(C, tile_c)
    D_pad = _round_up(D, 128)
    nb = B_pad // tile_b
    nc = C_pad // tile_c

    cos_m = math.cos(margin)
    sin_m = math.sin(margin)
    th = math.cos(math.pi - margin)
    mm = math.sin(math.pi - margin) * margin

    # --- wrapper glue: embedding L2-normalize + cast + pad (O(B*D), tiny) ---
    e = embedding.astype(f32)
    e = e * lax.rsqrt(jnp.maximum(jnp.sum(e * e, axis=1, keepdims=True), 1e-24))
    emb_p = jnp.zeros((B_pad, D_pad), mxu_dtype).at[:B, :D].set(e.astype(mxu_dtype))
    lbl_p = jnp.zeros((B_pad, 1), jnp.int32).at[:B, 0].set(label.astype(jnp.int32))

    # --- pass 1: normalize weight rows once, emit W^T (no wrapper transpose) ---
    w_in = weight.astype(f32)
    if D_pad != D:
        w_in = jnp.pad(w_in, ((0, 0), (0, D_pad - D)))
    w_t = pl.pallas_call(
        _make_wnorm_t_kernel(C, tile_c),
        out_shape=jax.ShapeDtypeStruct((D_pad, C_pad), mxu_dtype),
        grid=(nc,),
        in_specs=[pl.BlockSpec((tile_c, D_pad), lambda i: (i, 0))],
        out_specs=pl.BlockSpec((D_pad, tile_c), lambda i: (0, i)),
        compiler_params=pltpu.CompilerParams(
            dimension_semantics=("parallel",),
            vmem_limit_bytes=64 * 1024 * 1024),
    )(w_in)

    # --- pass 2: tiled cosine -> online-softmax CE with target-only margin ---
    kernel = _make_aam_kernel(
        cos_m, sin_m, th, mm, scale, pad_cols=C_pad - C,
        highest_precision=(jnp.dtype(mxu_dtype) == jnp.dtype(jnp.float32)))

    per_row = pl.pallas_call(
        kernel,
        out_shape=jax.ShapeDtypeStruct((B_pad, 1), f32),
        grid=(nb, nc),
        in_specs=[
            pl.BlockSpec((tile_b, 1), lambda b, c: (b, 0)),       # label
            pl.BlockSpec((tile_b, D_pad), lambda b, c: (b, 0)),   # normalized emb
            pl.BlockSpec((D_pad, tile_c), lambda b, c: (0, c)),   # normalized W^T
        ],
        out_specs=pl.BlockSpec((tile_b, 1), lambda b, c: (b, 0)),
        scratch_shapes=[
            pltpu.VMEM((tile_b, 1), f32),   # running max
            pltpu.VMEM((tile_b, 1), f32),   # running sum(exp)
            pltpu.VMEM((tile_b, 1), f32),   # target cosine
        ],
        compiler_params=pltpu.CompilerParams(
            dimension_semantics=("parallel", "arbitrary"),
            vmem_limit_bytes=64 * 1024 * 1024),
    )(lbl_p, emb_p, w_t)

    # Mean over the true (unpadded) batch.
    return jnp.sum(per_row[:B, 0]) / B


def _reference_loss(embedding, weight, label, margin=0.2, scale=32.0):
    """Pure-JAX reference mirroring the PyTorch forward (full-f32 matmul)."""
    cos_m = math.cos(margin)
    sin_m = math.sin(margin)
    th = math.cos(math.pi - margin)
    mm = math.sin(math.pi - margin) * margin
    eps = 1e-12
    e = embedding / jnp.maximum(
        jnp.linalg.norm(embedding, axis=1, keepdims=True), eps)
    w = weight / jnp.maximum(
        jnp.linalg.norm(weight, axis=1, keepdims=True), eps)
    cosine = jnp.dot(e, w.T, precision=jax.lax.Precision.HIGHEST)
    sine = jnp.sqrt(jnp.maximum(1.0 - cosine ** 2, 0.0))
    phi = cosine * cos_m - sine * sin_m
    phi = jnp.where(cosine > th, phi, cosine - mm)
    one_hot = jax.nn.one_hot(label, weight.shape[0], dtype=jnp.float32)
    logits = scale * (one_hot * phi + (1.0 - one_hot) * cosine)
    logp = jax.nn.log_softmax(logits, axis=1)
    return -jnp.mean(jnp.sum(one_hot * logp, axis=1))


if __name__ == "__main__":
    # Small shapes that still exercise multi-tile paths (2 batch tiles, up to
    # 3 class tiles, padding along D, C and B lanes).
    B, D, C = 16, 48, 300
    key = jax.random.PRNGKey(0)
    k_emb, k_w, k_lbl = jax.random.split(key, 3)

    embedding = jax.random.normal(k_emb, (B, D), dtype=jnp.float32)

    # xavier_uniform_ for weight of shape (num_classes, in_features)
    bound = math.sqrt(6.0 / (C + D))
    weight = jax.random.uniform(k_w, (C, D), dtype=jnp.float32,
                                minval=-bound, maxval=bound)

    label = jax.random.randint(k_lbl, (B,), 0, C, dtype=jnp.int32)

    ref = _reference_loss(embedding, weight, label)

    # f32 MXU path (faithful to the PyTorch module) -> strict check,
    # small tiles to exercise multi-tile batch and class axes.
    loss = aam_softmax_loss(embedding, weight, label, tile_b=8, tile_c=128,
                            mxu_dtype=jnp.float32)
    jax.block_until_ready(loss)
    assert jnp.allclose(loss, ref, rtol=1e-4, atol=1e-4), (loss, ref)

    # Default path: bf16 MXU operands (half the weight HBM stream, 2x MXU on
    # v5e/v6e), post-matmul math in f32. Loose tolerance for bf16 rounding.
    loss_bf16 = aam_softmax_loss(embedding, weight, label)
    jax.block_until_ready(loss_bf16)
    assert jnp.allclose(loss_bf16, ref, rtol=5e-2, atol=5e-2), (loss_bf16, ref)

    print("KERNEL_OK")
</pallas_src>

<mosaic_0001>
module attributes {stable_mosaic.version = 11 : i64} {
  func.func @kernel(%arg0: i32, %arg1: memref<128x128xf32, #tpu.memory_space<vmem>>, %arg2: memref<128x128xf32, #tpu.memory_space<vmem>>) attributes {dimension_semantics = [#tpu.dimension_semantics<parallel>], iteration_bounds = array<i64: 3>, scalar_prefetch = 0 : i64, scratch_operands = 0 : i64, tpu.core_type = #tpu.core_type<tc>, window_params = [{transform_indices = @transform_0, window_bounds = array<i64: 128, 128>}, {transform_indices = @transform_1, window_bounds = array<i64: 128, 128>}]} {
    %c0 = arith.constant 0 : index
    %c0_0 = arith.constant 0 : index
    %0 = vector.load %arg1[%c0, %c0_0] : memref<128x128xf32, #tpu.memory_space<vmem>>, vector<128x128xf32>
    %1 = arith.mulf %0, %0 : vector<128x128xf32>
    %cst = arith.constant dense<0.000000e+00> : vector<128xf32>
    %2 = vector.multi_reduction <add>, %1, %cst [1] : vector<128x128xf32> to vector<128xf32>
    %3 = vector.shape_cast %2 : vector<128xf32> to vector<128x1xf32>
    %cst_1 = arith.constant 1.000000e-24 : f32
    %4 = vector.broadcast %cst_1 : f32 to vector<128x1xf32>
    %5 = arith.maximumf %3, %4 : vector<128x1xf32>
    %6 = math.rsqrt %5 : vector<128x1xf32>
    %7 = vector.broadcast %6 : vector<128x1xf32> to vector<128x128xf32>
    %8 = arith.mulf %0, %7 : vector<128x128xf32>
    %9 = tpu.iota {dimensions = array<i32: 0>} : vector<128x128xi32>
    %c128_i32 = arith.constant 128 : i32
    %10 = arith.muli %arg0, %c128_i32 : i32
    %c300_i32 = arith.constant 300 : i32
    %11 = arith.subi %c300_i32, %10 : i32
    %12 = vector.broadcast %11 : i32 to vector<128x128xi32>
    %13 = arith.cmpi slt, %9, %12 : vector<128x128xi32>
    %cst_2 = arith.constant 0.000000e+00 : f32
    %14 = vector.broadcast %cst_2 : f32 to vector<128x128xf32>
    %15 = arith.select %13, %8, %14 : vector<128x128xi1>, vector<128x128xf32>
    %16 = tpu.transpose %15, [1, 0] : vector<128x128xf32> -> vector<128x128xf32>
    %c0_3 = arith.constant 0 : index
    %c0_4 = arith.constant 0 : index
    %17 = vector.load %arg2[%c0_3, %c0_4] : memref<128x128xf32, #tpu.memory_space<vmem>>, vector<128x128xf32>
    tpu.vector_store %arg2[%c0_3, %c0_4], %16 {strides = array<i32>} : memref<128x128xf32, #tpu.memory_space<vmem>>, vector<128x128xf32>,
    return
  }
  func.func @transform_0(%arg0: i32) -> (i32, i32) {
    %c0_i32 = arith.constant 0 : i32
    %c0_i32_0 = arith.constant 0 : i32
    return %arg0, %c0_i32 : i32, i32
  }
  func.func @transform_1(%arg0: i32) -> (i32, i32) {
    %c0_i32 = arith.constant 0 : i32
    %c0_i32_0 = arith.constant 0 : i32
    return %c0_i32, %arg0 : i32, i32
  }
}

</mosaic_0001>

<llo_original>
// kernel: tpu_custom_call.1
$region0: #{tpu_custom_call.1}
  #allocation0 [shape = 'u32[]', space=smem, size = 0x4, offset = 0x4, fixed_abs, tag = 'smem constant byte address 0x4 - core index']
  #allocation1 [shape = 'u32[144,128]{1,0:T(1,128)}', space=vmem, size = 0x12000, scoped, tag = 'internal scratch']
  %s0 = inlined_call_operand.hbm [shape: f32[300,128], index: 0, kind: input, shape index: {}]
  %s1 = inlined_call_operand.hbm [shape: f32[128,384], index: 1, kind: output, shape index: {}]
  %s2 = sld [smem:[#allocation0]]
  $region41: #{tpu_custom_call.1} parent=0
    _
  %s4 = ssub.s32 1, %s2
  %s5 = scalar_select 0, %s4, %s2
  $region1: #{tpu_custom_call.1} parent=0
    #allocation2 [shape = 'u8[131072]{0}', space=vmem, size = 0x20000, scoped, tag = 'input window, operand 0']
    #allocation3 [shape = 's32[2]{0}', space=sflag, size = 0x8, scoped, tag = 'scoped memory for tpu_custom_call.1']
    #allocation4 [shape = 's32[2]{0}', space=sflag, size = 0x8, scoped, tag = 'scoped memory for tpu_custom_call.1']
    #allocation5 [shape = 'u8[131072]{0}', space=vmem, size = 0x20000, scoped, tag = 'output window, operand 0']
    %6 = vsyncpa [#allocation3], 0
    %s7 = scalar_lea.sflag [#allocation3], 1
    %8 = vsyncpa %s7, 0
    %9 = vsyncpa [#allocation4], 0
    %s10 = scalar_lea.sflag [#allocation4], 1
    %11 = vsyncpa %s10, 0
    loop: start=0, step=1, limit=5
    $region2: #{tpu_custom_call.1} parent=1 // loop_pre_header
      _
    $region3: #{tpu_custom_call.1} parent=1 // loop_header
      %s13 = sphi 0, %s17
      %p14 = scmp.ge.s32.totalorder %s13, 5
      %s23 = sphi 0, %s25
      %s26 = sphi 0, %s23
      %s27 = sphi 0, %s26
      %s43 = sphi 0, %s27
      %s49 = sphi 0, %s51
      %s52 = sphi 0, %s49
      %s53 = sphi 0, %s52
      %s69 = sphi 0, %s53
    $region4: #{tpu_custom_call.1} parent=1 // loop_header_branch
      %16 = sbr.rel (%p14) target = $region8
    $region5: #{tpu_custom_call.1} parent=1 // loop_body
      %s18 = ssub.s32 %s13, 1
      %s19 = ssub.s32 %s13, 2
      %s20 = sadd.s32 %s13, 1
      %s21 = ssub.s32 %s13, %s20
      %p22 = scmp.eq.s32.totalorder %s21, 0
      %s24 = sadd.s32 %s23, 1
      %s25 = scalar_select %p22, %s23, %s24
      %p28 = pneg %p22
      %p29 = scmp.eq.s32.totalorder %s13, 2
      %p30 = por %p28, %p29
      %p31 = scmp.ne.s32.totalorder %s23, %s26
      %p32 = scmp.eq.s32.totalorder %s13, 0
      %p33 = por %p31, %p32
      %p34 = scmp.ne.s32.totalorder %s23, %s26
      %p35 = scmp.eq.s32.totalorder %s18, 2
      %p36 = por %p34, %p35
      %p37 = scmp.ne.s32.totalorder %s26, %s27
      %p38 = scmp.eq.s32.totalorder %s18, 0
      %p39 = por %p37, %p38
      %p40 = scmp.ne.s32.totalorder %s26, %s27
      %p41 = scmp.eq.s32.totalorder %s19, 2
      %p42 = por %p40, %p41
      %p44 = scmp.ne.s32.totalorder %s27, %s43
      %p45 = scmp.eq.s32.totalorder %s19, 0
      %p46 = por %p44, %p45
      %s47 = ssub.s32 %s13, %s20
      %p48 = scmp.eq.s32.totalorder %s47, 0
      %s50 = sadd.s32 %s49, 1
      %s51 = scalar_select %p48, %s49, %s50
      %p54 = pneg %p48
      %p55 = scmp.eq.s32.totalorder %s13, 2
      %p56 = por %p54, %p55
      %p57 = scmp.ne.s32.totalorder %s49, %s52
      %p58 = scmp.eq.s32.totalorder %s13, 0
      %p59 = por %p57, %p58
      %p60 = scmp.ne.s32.totalorder %s49, %s52
      %p61 = scmp.eq.s32.totalorder %s18, 2
      %p62 = por %p60, %p61
      %p63 = scmp.ne.s32.totalorder %s52, %s53
      %p64 = scmp.eq.s32.totalorder %s18, 0
      %p65 = por %p63, %p64
      %p66 = scmp.ne.s32.totalorder %s52, %s53
      %p67 = scmp.eq.s32.totalorder %s19, 2
      %p68 = por %p66, %p67
      %p70 = scmp.ne.s32.totalorder %s53, %s69
      %p71 = scmp.eq.s32.totalorder %s19, 0
      %p72 = por %p70, %p71
      %p73 = scmp.le.s32.totalorder 1, %s13
      %p74 = scmp.lt.s32.totalorder %s13, 4
      %p75 = pnand %p73, %p74
      %p76 = pneg %p75
      // Predicated region
      $region9: #{tpu_custom_call.1} parent=5 // pred_check
        _
      $region10: #{tpu_custom_call.1} parent=5 // pred_check_branch
        %78 = sbr.rel (%p75) target = $region12
      $region11: #{tpu_custom_call.1} parent=5 // pred_region
        %s79 = ssub.s32 %s13, 1
      $region12: #{tpu_custom_call.1} parent=5 // pred_fallthru
        _
      %p80 = scmp.lt.s32.totalorder %s13, 3
      // Predicated region
      $region13: #{tpu_custom_call.1} parent=5 // pred_check
        %p81 = pneg %p80
      $region14: #{tpu_custom_call.1} parent=5 // pred_check_branch
        %83 = sbr.rel (%p81) target = $region16
      $region15: #{tpu_custom_call.1} parent=5 // pred_region
        // Predicated region
        $region17: #{tpu_custom_call.1} parent=15 // pred_check
          %p84 = pneg %p33
        $region18: #{tpu_custom_call.1} parent=15 // pred_check_branch
          %86 = sbr.rel (%p84) target = $region20
        $region19: #{tpu_custom_call.1} parent=15 // pred_region
          %s87 = sand.u32 %s23, 1
          %s88 = scalar_lea.sflag [#allocation3], %s87
          %s89 = sand.u32 %s23, 1
          %s90 = smul.addr %s89, 128
          %s91 = scalar_lea.vmem [#allocation2], %s90
          %s92 = smul.u32 16, %s13
          %s93 = ssub.s32 38, %s92
          %p94 = scmp.lt.s32.totalorder %s93, 16
          %s95 = scalar_select %p94, %s93, 16
          %s96 = smul.u32 128, %s95
          %s98 = ssub.s32 2048, %s96
          %99 = vsyncadd %s88, %s98
          %p100 = scmp.ne.s32.totalorder 0, %s96
          %s101 = smul.addr %s92, 128
          %s102 = scalar_lea.hbm %s0, %s101
          %s103 = smul.u32 8, %s95
          %s104 = sshll.u32 %s91, 4
          %s105 = int_to_ptr.vmem [resolvable:$true] %s104
          %s106 = sshll.u32 %s103, 4
          %110 = dma.hbm_to_vmem [thread:$0]  (%p100), %s102, %s106, %s105, %s88, 128, 128, 8
        $region20: #{tpu_custom_call.1} parent=15 // pred_fallthru
          _
      $region16: #{tpu_custom_call.1} parent=5 // pred_fallthru
        _
      %p111 = scmp.le.s32.totalorder 1, %s13
      %p112 = scmp.lt.s32.totalorder %s13, 4
      %p113 = pnand %p111, %p112
      %p114 = pneg %p113
      // Predicated region
      $region21: #{tpu_custom_call.1} parent=5 // pred_check
        _
      $region22: #{tpu_custom_call.1} parent=5 // pred_check_branch
        %116 = sbr.rel (%p113) target = $region24
      $region23: #{tpu_custom_call.1} parent=5 // pred_region
        %s117 = ssub.s32 %s13, 1
        %s118 = sand.u32 %s26, 1
        %s119 = scalar_lea.sflag [#allocation3], %s118
        %s120 = sand.u32 %s26, 1
        %s121 = smul.addr %s120, 128
        %s122 = scalar_lea.vmem [#allocation2], %s121
        // Predicated region
        $region25: #{tpu_custom_call.1} parent=23 // pred_check
          %p123 = pneg %p39
        $region26: #{tpu_custom_call.1} parent=23 // pred_check_branch
          %125 = sbr.rel (%p123) target = $region28
        $region27: #{tpu_custom_call.1} parent=23 // pred_region
          %126 = dma.done %s119, 2048
        $region28: #{tpu_custom_call.1} parent=23 // pred_fallthru
          _
        %s127 = sand.u32 %s26, 1
        %s128 = scalar_lea.sflag [#allocation3], %s127
        %s129 = sand.u32 %s26, 1
        %s130 = smul.addr %s129, 128
        %s131 = scalar_lea.vmem [#allocation2], %s130
        %p132 = pneg %p39
        %p133 = pneg %p36
        %p134 = pneg %p65
        %p135 = pneg %p62
        %s136 = sand.u32 %s52, 1
        %s137 = scalar_lea.sflag [#allocation4], %s136
        %s138 = sand.u32 %s52, 1
        %s139 = smul.addr %s138, 128
        %s140 = scalar_lea.vmem [#allocation5], %s139
        %s141 = smul.u32 16, %s18
        %s142 = ssub.s32 38, %s141
        %p143 = scmp.lt.s32.totalorder %s142, 16
        %s144 = scalar_select %p143, %s142, 16
        %s145 = smul.u32 128, %s144
        %v146 = vld [vmem:[%s122] sm:$0xff]
        %v147 = vld [vmem:[%s122 + $0x8] sm:$0xff]
        %v148 = vld [vmem:[%s122 + $0x10] sm:$0xff]
        %v149 = vld [vmem:[%s122 + $0x18] sm:$0xff]
        %v150 = vld [vmem:[%s122 + $0x20] sm:$0xff]
        %v151 = vld [vmem:[%s122 + $0x28] sm:$0xff]
        %v152 = vld [vmem:[%s122 + $0x30] sm:$0xff]
        %v153 = vld [vmem:[%s122 + $0x38] sm:$0xff]
        %v154 = vld [vmem:[%s122 + $0x40] sm:$0xff]
        %v155 = vld [vmem:[%s122 + $0x48] sm:$0xff]
        %v156 = vld [vmem:[%s122 + $0x50] sm:$0xff]
        %v157 = vld [vmem:[%s122 + $0x58] sm:$0xff]
        %v158 = vld [vmem:[%s122 + $0x60] sm:$0xff]
        %v159 = vld [vmem:[%s122 + $0x68] sm:$0xff]
        %v160 = vld [vmem:[%s122 + $0x70] sm:$0xff]
        %v161 = vld [vmem:[%s122 + $0x78] sm:$0xff]
        %v162 = vmul.f32 %v146, %v146
        %v163 = vmul.f32 %v147, %v147
        %v164 = vmul.f32 %v148, %v148
        %v165 = vmul.f32 %v149, %v149
        %v166 = vmul.f32 %v150, %v150
        %v167 = vmul.f32 %v151, %v151
        %v168 = vmul.f32 %v152, %v152
        %v169 = vmul.f32 %v153, %v153
        %v170 = vmul.f32 %v154, %v154
        %v171 = vmul.f32 %v155, %v155
        %v172 = vmul.f32 %v156, %v156
        %v173 = vmul.f32 %v157, %v157
        %v174 = vmul.f32 %v158, %v158
        %v175 = vmul.f32 %v159, %v159
        %v176 = vmul.f32 %v160, %v160
        %v177 = vmul.f32 %v161, %v161
        %178 = vadd.xlane.f32.xlu0 %v162
        %v179 = vpop.xlane.xlu0 %178
        %180 = vadd.xlane.f32.xlu0 %v163
        %v181 = vpop.xlane.xlu0 %180
        %182 = vadd.xlane.f32.xlu0 %v164
        %v183 = vpop.xlane.xlu0 %182
        %184 = vadd.xlane.f32.xlu0 %v165
        %v185 = vpop.xlane.xlu0 %184
        %186 = vadd.xlane.f32.xlu0 %v166
        %v187 = vpop.xlane.xlu0 %186
        %188 = vadd.xlane.f32.xlu0 %v167
        %v189 = vpop.xlane.xlu0 %188
        %190 = vadd.xlane.f32.xlu0 %v168
        %v191 = vpop.xlane.xlu0 %190
        %192 = vadd.xlane.f32.xlu0 %v169
        %v193 = vpop.xlane.xlu0 %192
        %194 = vadd.xlane.f32.xlu0 %v170
        %v195 = vpop.xlane.xlu0 %194
        %196 = vadd.xlane.f32.xlu0 %v171
        %v197 = vpop.xlane.xlu0 %196
        %198 = vadd.xlane.f32.xlu0 %v172
        %v199 = vpop.xlane.xlu0 %198
        %200 = vadd.xlane.f32.xlu0 %v173
        %v201 = vpop.xlane.xlu0 %200
        %202 = vadd.xlane.f32.xlu0 %v174
        %v203 = vpop.xlane.xlu0 %202
        %204 = vadd.xlane.f32.xlu0 %v175
        %v205 = vpop.xlane.xlu0 %204
        %206 = vadd.xlane.f32.xlu0 %v176
        %v207 = vpop.xlane.xlu0 %206
        %208 = vadd.xlane.f32.xlu0 %v177
        %v209 = vpop.xlane.xlu0 %208
        %v210 = vmax.f32 %v179, 1e-24
        %v211 = vmax.f32 %v181, 1e-24
        %v212 = vmax.f32 %v183, 1e-24
        %v213 = vmax.f32 %v185, 1e-24
        %v214 = vmax.f32 %v187, 1e-24
        %v215 = vmax.f32 %v189, 1e-24
        %v216 = vmax.f32 %v191, 1e-24
        %v217 = vmax.f32 %v193, 1e-24
        %v218 = vmax.f32 %v195, 1e-24
        %v219 = vmax.f32 %v197, 1e-24
        %v220 = vmax.f32 %v199, 1e-24
        %v221 = vmax.f32 %v201, 1e-24
        %v222 = vmax.f32 %v203, 1e-24
        %v223 = vmax.f32 %v205, 1e-24
        %v224 = vmax.f32 %v207, 1e-24
        %v225 = vmax.f32 %v209, 1e-24
        %v226 = vrsqrt.pop %v210
        %v227 = vrsqrt.pop %v211
        %v228 = vrsqrt.pop %v212
        %v229 = vrsqrt.pop %v213
        %v230 = vrsqrt.pop %v214
        %v231 = vrsqrt.pop %v215
        %v232 = vrsqrt.pop %v216
        %v233 = vrsqrt.pop %v217
        %v234 = vrsqrt.pop %v218
        %v235 = vrsqrt.pop %v219
        %v236 = vrsqrt.pop %v220
        %v237 = vrsqrt.pop %v221
        %v238 = vrsqrt.pop %v222
        %v239 = vrsqrt.pop %v223
        %v240 = vrsqrt.pop %v224
        %v241 = vrsqrt.pop %v225
        %v242 = vmul.f32 %v146, %v226
        %v243 = vmul.f32 %v147, %v227
        %v244 = vmul.f32 %v148, %v228
        %v245 = vmul.f32 %v149, %v229
        %v246 = vmul.f32 %v150, %v230
        %v247 = vmul.f32 %v151, %v231
        %v248 = vmul.f32 %v152, %v232
        %v249 = vmul.f32 %v153, %v233
        %v250 = vmul.f32 %v154, %v234
        %v251 = vmul.f32 %v155, %v235
        %v252 = vmul.f32 %v156, %v236
        %v253 = vmul.f32 %v157, %v237
        %v254 = vmul.f32 %v158, %v238
        %v255 = vmul.f32 %v159, %v239
        %v256 = vmul.f32 %v160, %v240
        %v257 = vmul.f32 %v161, %v241
        %v258 = vlaneseq
        %v259 = vshrl.u32 %v258, 7
        %v260 = vadd.s32 %v259, 8
        %v261 = vadd.s32 %v259, 16
        %v262 = vadd.s32 %v259, 24
        %v263 = vadd.s32 %v259, 32
        %v264 = vadd.s32 %v259, 40
        %v265 = vadd.s32 %v259, 48
        %v266 = vadd.s32 %v259, 56
        %v267 = vadd.s32 %v259, 64
        %v268 = vadd.s32 %v259, 72
        %v269 = vadd.s32 %v259, 80
        %v270 = vadd.s32 %v259, 88
        %v271 = vadd.s32 %v259, 96
        %v272 = vadd.s32 %v259, 104
        %v273 = vadd.s32 %v259, 112
        %v274 = vadd.s32 %v259, 120
        %s275 = smul.u32 %s18, 128
        %s276 = ssub.s32 300, %s275
        %v277 = vstv %s276
        %vm278 = vcmp.lt.s32.totalorder %v259, %v277
        %vm279 = vcmp.lt.s32.totalorder %v260, %v277
        %vm280 = vcmp.lt.s32.totalorder %v261, %v277
        %vm281 = vcmp.lt.s32.totalorder %v262, %v277
        %vm282 = vcmp.lt.s32.totalorder %v263, %v277
        %vm283 = vcmp.lt.s32.totalorder %v264, %v277
        %vm284 = vcmp.lt.s32.totalorder %v265, %v277
        %vm285 = vcmp.lt.s32.totalorder %v266, %v277
        %vm286 = vcmp.lt.s32.totalorder %v267, %v277
        %vm287 = vcmp.lt.s32.totalorder %v268, %v277
        %vm288 = vcmp.lt.s32.totalorder %v269, %v277
        %vm289 = vcmp.lt.s32.totalorder %v270, %v277
        %vm290 = vcmp.lt.s32.totalorder %v271, %v277
        %vm291 = vcmp.lt.s32.totalorder %v272, %v277
        %vm292 = vcmp.lt.s32.totalorder %v273, %v277
        %vm293 = vcmp.lt.s32.totalorder %v274, %v277
        %v294 = vsel %vm278, %v242, 0.0
        %v295 = vsel %vm279, %v243, 0.0
        %v296 = vsel %vm280, %v244, 0.0
        %v297 = vsel %vm281, %v245, 0.0
        %v298 = vsel %vm282, %v246, 0.0
        %v299 = vsel %vm283, %v247, 0.0
        %v300 = vsel %vm284, %v248, 0.0
        %v301 = vsel %vm285, %v249, 0.0
        %v302 = vsel %vm286, %v250, 0.0
        %v303 = vsel %vm287, %v251, 0.0
        %v304 = vsel %vm288, %v252, 0.0
        %v305 = vsel %vm289, %v253, 0.0
        %v306 = vsel %vm290, %v254, 0.0
        %v307 = vsel %vm291, %v255, 0.0
        %v308 = vsel %vm292, %v256, 0.0
        %v309 = vsel %vm293, %v257, 0.0
        %310 = vxpose.xlu0.b32.start [1/16] %v294, 128
        %311 = vxpose.xlu0.b32.cont [2/16] %v295, 128
        %312 = vxpose.xlu0.b32.cont [3/16] %v296, 128
        %313 = vxpose.xlu0.b32.cont [4/16] %v297, 128
        %314 = vxpose.xlu0.b32.cont [5/16] %v298, 128
        %315 = vxpose.xlu0.b32.cont [6/16] %v299, 128
        %316 = vxpose.xlu0.b32.cont [7/16] %v300, 128
        %317 = vxpose.xlu0.b32.cont [8/16] %v301, 128
        %318 = vxpose.xlu0.b32.cont [9/16] %v302, 128
        %319 = vxpose.xlu0.b32.cont [10/16] %v303, 128
        %320 = vxpose.xlu0.b32.cont [11/16] %v304, 128
        %321 = vxpose.xlu0.b32.cont [12/16] %v305, 128
        %322 = vxpose.xlu0.b32.cont [13/16] %v306, 128
        %323 = vxpose.xlu0.b32.cont [14/16] %v307, 128
        %324 = vxpose.xlu0.b32.cont [15/16] %v308, 128
        %325 = vxpose.xlu0.b32.end [16/16] %v309, 128
        %v326 = vpop.trf.xlu0
        %v327 = vpop.trf.xlu0
        %v328 = vpop.trf.xlu0
        %v329 = vpop.trf.xlu0
        %v330 = vpop.trf.xlu0
        %v331 = vpop.trf.xlu0
        %v332 = vpop.trf.xlu0
        %v333 = vpop.trf.xlu0
        %v334 = vpop.trf.xlu0
        %v335 = vpop.trf.xlu0
        %v336 = vpop.trf.xlu0
        %v337 = vpop.trf.xlu0
        %v338 = vpop.trf.xlu0
        %v339 = vpop.trf.xlu0
        %v340 = vpop.trf.xlu0
        %v341 = vpop.trf.xlu0
        %342 = vst [vmem:[%s140] sm:$0xff] %v326
        %343 = vst [vmem:[%s140 + $0x8] sm:$0xff] %v327
        %344 = vst [vmem:[%s140 + $0x10] sm:$0xff] %v328
        %345 = vst [vmem:[%s140 + $0x18] sm:$0xff] %v329
        %346 = vst [vmem:[%s140 + $0x20] sm:$0xff] %v330
        %347 = vst [vmem:[%s140 + $0x28] sm:$0xff] %v331
        %348 = vst [vmem:[%s140 + $0x30] sm:$0xff] %v332
        %349 = vst [vmem:[%s140 + $0x38] sm:$0xff] %v333
        %350 = vst [vmem:[%s140 + $0x40] sm:$0xff] %v334
        %351 = vst [vmem:[%s140 + $0x48] sm:$0xff] %v335
        %352 = vst [vmem:[%s140 + $0x50] sm:$0xff] %v336
        %353 = vst [vmem:[%s140 + $0x58] sm:$0xff] %v337
        %354 = vst [vmem:[%s140 + $0x60] sm:$0xff] %v338
        %355 = vst [vmem:[%s140 + $0x68] sm:$0xff] %v339
        %356 = vst [vmem:[%s140 + $0x70] sm:$0xff] %v340
        %357 = vst [vmem:[%s140 + $0x78] sm:$0xff] %v341
        %s358 = sand.u32 %s52, 1
        %s359 = scalar_lea.sflag [#allocation4], %s358
        %s360 = sand.u32 %s52, 1
        %s361 = smul.addr %s360, 128
        %s362 = scalar_lea.vmem [#allocation5], %s361
        // Predicated region
        $region29: #{tpu_custom_call.1} parent=23 // pred_check
          %p363 = pneg %p62
        $region30: #{tpu_custom_call.1} parent=23 // pred_check_branch
          %365 = sbr.rel (%p363) target = $region32
        $region31: #{tpu_custom_call.1} parent=23 // pred_region
          %s367 = ssub.s32 2048, 2048
          %368 = vsyncadd %s359, %s367
          %s369 = smul.addr %s18, 128
          %s370 = scalar_lea.hbm %s1, %s369
          %s371 = sshll.u32 %s362, 4
          %s372 = int_to_ptr.vmem [resolvable:$true] %s371
          %377 = dma.vmem_to_hbm [thread:$0]  %s372, 2048, %s370, %s359, 128, 384, 8
        $region32: #{tpu_custom_call.1} parent=23 // pred_fallthru
          _
      $region24: #{tpu_custom_call.1} parent=5 // pred_fallthru
        _
      %p378 = scmp.le.s32.totalorder 2, %s13
      // Predicated region
      $region33: #{tpu_custom_call.1} parent=5 // pred_check
        %p379 = pneg %p378
      $region34: #{tpu_custom_call.1} parent=5 // pred_check_branch
        %381 = sbr.rel (%p379) target = $region36
      $region35: #{tpu_custom_call.1} parent=5 // pred_region
        %s382 = ssub.s32 %s13, 2
        // Predicated region
        $region37: #{tpu_custom_call.1} parent=35 // pred_check
          %p383 = pneg %p68
        $region38: #{tpu_custom_call.1} parent=35 // pred_check_branch
          %385 = sbr.rel (%p383) target = $region40
        $region39: #{tpu_custom_call.1} parent=35 // pred_region
          %s386 = sand.u32 %s53, 1
          %s387 = scalar_lea.sflag [#allocation4], %s386
          %s388 = sand.u32 %s53, 1
          %s389 = smul.addr %s388, 128
          %s390 = scalar_lea.vmem [#allocation5], %s389
          %391 = dma.done %s387, 2048
        $region40: #{tpu_custom_call.1} parent=35 // pred_fallthru
          _
      $region36: #{tpu_custom_call.1} parent=5 // pred_fallthru
        _
    $region6: #{tpu_custom_call.1} parent=1 // loop_footer
      %s17 = sadd.s32 1, %s13
    $region7: #{tpu_custom_call.1} parent=1 // loop_footer_branch
      %12 = sbr.rel target = $region3
    $region8: #{tpu_custom_call.1} parent=1 // loop_exit
      _
    %392 = vsyncpa [#allocation3], 1
    %s393 = scalar_lea.sflag [#allocation3], 1
    %394 = vsyncpa %s393, 1
    %395 = vsyncpa [#allocation4], 1
    %s396 = scalar_lea.sflag [#allocation4], 1
    %397 = vsyncpa %s396, 1

</llo_original>
